<compile_context>
chip_gen: v5e
topology: v5e:2x2
jax: 0.10.0
libtpu: 0.0.40
codegen_flags: <defaults>
</compile_context>

<pallas_src>
import jax
import jax.numpy as jnp
from jax.experimental import pallas as pl
from jax.experimental.pallas import tpu as pltpu


def _avvp_criterion_kernel(probs_ref, tgts_ref, out_ref):
    """Fused AVVP loss.

    probs_ref / tgts_ref: (B, 3*C) lane-packed as [global | audio | visual].
    out_ref: (1, 1) scalar result in SMEM.
    """
    eps = jnp.float32(1e-7)
    one = jnp.float32(1.0)
    two = jnp.float32(2.0)
    margin = jnp.float32(1.0)

    # One clip and two log passes over the packed slab (a single vreg at the
    # AVVP shapes) instead of 3x each on separate padded inputs.
    p = jnp.clip(probs_ref[...].astype(jnp.float32), eps, one - eps)
    t = tgts_ref[...].astype(jnp.float32)

    log_p = jnp.log(p)
    log_1mp = jnp.log(one - p)
    bce_elem = -(t * log_p + (one - t) * log_1mp)          # (B, 3C)

    c = p.shape[1] // 3
    # MSE term uses the *clamped* a/v probs (torch clamp_ is in-place, so the
    # clamped values feed both the BCE and the MSE).
    ap = p[:, c:2 * c]
    vp = p[:, 2 * c:3 * c]
    sq = (ap - vp) ** 2                                     # (B, C)

    # loss = bce(gp,tgt) + [bce(ap,pa)+m-mse] + [bce(vp,pv)+m-mse]
    #      = mean(bce_gp + bce_ap + bce_vp - 2*sq) + 2*m
    # -> a single cross-lane reduction instead of four.
    fused = (bce_elem[:, :c] + bce_elem[:, c:2 * c] + bce_elem[:, 2 * c:]
             - two * sq)
    out_ref[0, 0] = jnp.mean(fused) + two * margin


@jax.jit
def avvp_criterion(global_prob, a_prob, v_prob, target, pa, pv):
    """Returns the scalar AVVP loss (float32), matching the torch forward."""
    B, C = global_prob.shape
    f32 = jnp.float32

    # Pack six (B, C) inputs into two lane-dense (B, 3C) slabs wrapper-side.
    probs = jnp.concatenate(
        [global_prob.astype(f32), a_prob.astype(f32), v_prob.astype(f32)],
        axis=-1)
    tgts = jnp.concatenate(
        [target.astype(f32), pa.astype(f32), pv.astype(f32)], axis=-1)

    n = B * 3 * C
    out = pl.pallas_call(
        _avvp_criterion_kernel,
        out_shape=jax.ShapeDtypeStruct((1, 1), jnp.float32),
        in_specs=[pl.BlockSpec(memory_space=pltpu.VMEM),
                  pl.BlockSpec(memory_space=pltpu.VMEM)],
        out_specs=pl.BlockSpec(memory_space=pltpu.SMEM),
        cost_estimate=pl.CostEstimate(
            flops=12 * n,               # clip/BCE/MSE/combine elementwise work
            transcendentals=2 * n,      # two log passes over the packed slab
            bytes_accessed=2 * n * 4 + 4),
    )(probs, tgts)
    return out[0, 0]


def avvp_criterion_ref(global_prob, a_prob, v_prob, target, pa, pv):
    """Pure-JAX reference mirroring the PyTorch forward."""
    eps = 1e-7
    gp = jnp.clip(global_prob.astype(jnp.float32), eps, 1.0 - eps)
    ap = jnp.clip(a_prob.astype(jnp.float32), eps, 1.0 - eps)
    vp = jnp.clip(v_prob.astype(jnp.float32), eps, 1.0 - eps)

    def bce(p, t):
        return jnp.mean(-(t * jnp.log(p) + (1.0 - t) * jnp.log(1.0 - p)))

    mse = jnp.mean((ap - vp) ** 2)
    return (bce(gp, target) +
            (bce(ap, pa) + 1.0 - mse) +
            (bce(vp, pv) + 1.0 - mse))


if __name__ == "__main__":
    # Small AVVP-like shapes: batch=2, num_classes=25 (AVVP event classes).
    B, C = 2, 25
    key = jax.random.PRNGKey(0)
    k_gp, k_ap, k_vp, k_t, k_pa, k_pv = jax.random.split(key, 6)

    # Probabilities in (0,1) via sigmoid of gaussian logits.
    global_prob = jax.nn.sigmoid(jax.random.normal(k_gp, (B, C), jnp.float32))
    a_prob = jax.nn.sigmoid(jax.random.normal(k_ap, (B, C), jnp.float32))
    v_prob = jax.nn.sigmoid(jax.random.normal(k_vp, (B, C), jnp.float32))

    # Binary/soft targets.
    target = jax.random.bernoulli(k_t, 0.3, (B, C)).astype(jnp.float32)
    pa = jax.random.bernoulli(k_pa, 0.3, (B, C)).astype(jnp.float32)
    pv = jax.random.bernoulli(k_pv, 0.3, (B, C)).astype(jnp.float32)

    loss = jax.block_until_ready(
        avvp_criterion(global_prob, a_prob, v_prob, target, pa, pv))
    loss_ref = avvp_criterion_ref(global_prob, a_prob, v_prob, target, pa, pv)

    assert jnp.allclose(loss, loss_ref, rtol=1e-5, atol=1e-5), (loss, loss_ref)
    print("KERNEL_OK")
</pallas_src>

<mosaic_0001>
module attributes {stable_mosaic.version = 11 : i64} {
  func.func @_avvp_criterion_kernel(%arg0: memref<2x75xf32, #tpu.memory_space<vmem>>, %arg1: memref<2x75xf32, #tpu.memory_space<vmem>>, %arg2: memref<1x1xf32, #tpu.memory_space<smem>>) attributes {dimension_semantics = [], scalar_prefetch = 0 : i64, scratch_operands = 0 : i64, tpu.core_type = #tpu.core_type<tc>} {
    %c0 = arith.constant 0 : index
    %c0_0 = arith.constant 0 : index
    %0 = vector.load %arg0[%c0, %c0_0] : memref<2x75xf32, #tpu.memory_space<vmem>>, vector<2x75xf32>
    %cst = arith.constant 1.000000e+00 : f32
    %cst_1 = arith.constant 1.000000e-07 : f32
    %1 = arith.subf %cst, %cst_1 : f32
    %cst_2 = arith.constant 1.000000e-07 : f32
    %2 = vector.broadcast %cst_2 : f32 to vector<2x75xf32>
    %3 = arith.maximumf %2, %0 : vector<2x75xf32>
    %4 = vector.broadcast %1 : f32 to vector<2x75xf32>
    %5 = arith.minimumf %4, %3 : vector<2x75xf32>
    %c0_3 = arith.constant 0 : index
    %c0_4 = arith.constant 0 : index
    %6 = vector.load %arg1[%c0_3, %c0_4] : memref<2x75xf32, #tpu.memory_space<vmem>>, vector<2x75xf32>
    %7 = math.log %5 : vector<2x75xf32>
    %cst_5 = arith.constant 1.000000e+00 : f32
    %8 = vector.broadcast %cst_5 : f32 to vector<2x75xf32>
    %9 = arith.subf %8, %5 : vector<2x75xf32>
    %10 = math.log %9 : vector<2x75xf32>
    %11 = arith.mulf %6, %7 : vector<2x75xf32>
    %cst_6 = arith.constant 1.000000e+00 : f32
    %12 = vector.broadcast %cst_6 : f32 to vector<2x75xf32>
    %13 = arith.subf %12, %6 : vector<2x75xf32>
    %14 = arith.mulf %13, %10 : vector<2x75xf32>
    %15 = arith.addf %11, %14 : vector<2x75xf32>
    %cst_7 = arith.constant 0.000000e+00 : f32
    %16 = vector.broadcast %cst_7 : f32 to vector<2x75xf32>
    %17 = arith.subf %16, %15 : vector<2x75xf32>
    %18 = vector.extract_strided_slice %5 {offsets = [0, 25], sizes = [2, 25], strides = [1, 1]} : vector<2x75xf32> to vector<2x25xf32>
    %19 = vector.extract_strided_slice %5 {offsets = [0, 50], sizes = [2, 25], strides = [1, 1]} : vector<2x75xf32> to vector<2x25xf32>
    %20 = arith.subf %18, %19 : vector<2x25xf32>
    %21 = arith.mulf %20, %20 : vector<2x25xf32>
    %22 = vector.extract_strided_slice %17 {offsets = [0, 0], sizes = [2, 25], strides = [1, 1]} : vector<2x75xf32> to vector<2x25xf32>
    %23 = vector.extract_strided_slice %17 {offsets = [0, 25], sizes = [2, 25], strides = [1, 1]} : vector<2x75xf32> to vector<2x25xf32>
    %24 = arith.addf %22, %23 : vector<2x25xf32>
    %25 = vector.extract_strided_slice %17 {offsets = [0, 50], sizes = [2, 25], strides = [1, 1]} : vector<2x75xf32> to vector<2x25xf32>
    %26 = arith.addf %24, %25 : vector<2x25xf32>
    %cst_8 = arith.constant 2.000000e+00 : f32
    %27 = vector.broadcast %cst_8 : f32 to vector<2x25xf32>
    %28 = arith.mulf %27, %21 : vector<2x25xf32>
    %29 = arith.subf %26, %28 : vector<2x25xf32>
    %30 = vector.shape_cast %29 : vector<2x25xf32> to vector<1x2x25xf32>
    %cst_9 = arith.constant dense<0.000000e+00> : vector<1xf32>
    %31 = vector.multi_reduction <add>, %30, %cst_9 [1, 2] : vector<1x2x25xf32> to vector<1xf32>
    %32 = vector.shape_cast %31 : vector<1xf32> to vector<1x1x1xf32>
    %33 = vector.extract %32[0, 0, 0] : f32 from vector<1x1x1xf32>
    %cst_10 = arith.constant 5.000000e+01 : f32
    %34 = arith.divf %33, %cst_10 : f32
    %cst_11 = arith.constant 2.000000e+00 : f32
    %cst_12 = arith.constant 1.000000e+00 : f32
    %35 = arith.mulf %cst_11, %cst_12 : f32
    %36 = arith.addf %34, %35 : f32
    %c0_13 = arith.constant 0 : index
    %c0_14 = arith.constant 0 : index
    %37 = memref.load %arg2[%c0_13, %c0_14] : memref<1x1xf32, #tpu.memory_space<smem>>
    memref.store %36, %arg2[%c0_13, %c0_14] : memref<1x1xf32, #tpu.memory_space<smem>>
    return
  }
}

</mosaic_0001>

<llo_original>
// kernel: avvp_criterion.1
$region0: #{avvp_criterion.1}
  #allocation0 [shape = 'u32[]', space=smem, size = 0x4, offset = 0x4, fixed_abs, tag = 'smem constant byte address 0x4 - core index']
  #allocation1 [shape = 'u32[72,128]{1,0:T(1,128)}', space=vmem, size = 0x9000, scoped, tag = 'internal scratch']
  %s0 = inlined_call_operand.vmem [shape: f32[2,75], index: 0, kind: input, shape index: {}]
  %s1 = inlined_call_operand.vmem [shape: f32[2,75], index: 1, kind: input, shape index: {}]
  %s2 = inlined_call_operand.hbm [shape: f32[1,1], index: 2, kind: output, shape index: {}]
  %s3 = sld [smem:[#allocation0]]
  $region18: #{avvp_criterion.1} parent=0
    _
  %s5 = ssub.s32 1, %s3
  %s6 = scalar_select 0, %s5, %s3
  $region1: #{avvp_criterion.1} parent=0
    #allocation2 [shape = 'u8[512]{0}', space=smem, size = 0x200, scoped, tag = 'output window, operand 0, single buffered']
    #allocation3 [shape = 's32[1]{0}', space=sflag, size = 0x4, scoped, tag = 'scoped memory for avvp_criterion.1']
    %7 = vsyncpa [#allocation3], 0
    // Predicated region
    $region2: #{avvp_criterion.1} parent=1 // pred_check
      _
    $region3: #{avvp_criterion.1} parent=1 // pred_check_branch
      %9 = sbr.rel (0) target = $region5
    $region4: #{avvp_criterion.1} parent=1 // pred_region
      _
    $region5: #{avvp_criterion.1} parent=1 // pred_fallthru
      _
    // Predicated region
    $region6: #{avvp_criterion.1} parent=1 // pred_check
      _
    $region7: #{avvp_criterion.1} parent=1 // pred_check_branch
      %11 = sbr.rel (0) target = $region9
    $region8: #{avvp_criterion.1} parent=1 // pred_region
      _
    $region9: #{avvp_criterion.1} parent=1 // pred_fallthru
      _
    %v12 = vld [vmem:[%s0] sm:$0x3]
    %v13 = vmax.f32 %v12, 1e-07
    %v14 = vmin.f32 %v13, 0.9999999
    %v15 = vld [vmem:[%s1] sm:$0x3]
    %v16 = vlog2.pop %v14
    %v17 = vmul.f32 %v16, 0.6931472
    %v18 = vsub.f32 1.0, %v14
    %v19 = vlog2.pop %v18
    %v20 = vmul.f32 %v19, 0.6931472
    %v21 = vmul.f32 %v15, %v17
    %v22 = vsub.f32 1.0, %v15
    %v23 = vmul.f32 %v22, %v20
    %v24 = vadd.f32 %v21, %v23
    %v25 = vsub.f32 0.0, %v24
    %27 = vrot.lane.b32.xlu0 %v14, 103
    %v28 = vpop.permute.xlu0 %27
    %v30 = vsub.f32 %v14, %v28
    %v31 = vmul.f32 %v30, %v30
    %33 = vrot.lane.b32.xlu0 %v25, 103
    %v34 = vpop.permute.xlu0 %33
    %v36 = vadd.f32 %v25, %v34
    %37 = vrot.lane.b32.xlu0 %v25, 78
    %v38 = vpop.permute.xlu0 %37
    %v40 = vadd.f32 %v36, %v38
    %v41 = vmul.f32 %v31, 2.0
    %43 = vrot.lane.b32.xlu0 %v41, 103
    %v44 = vpop.permute.xlu0 %43
    %v46 = vsub.f32 %v40, %v44
    %vm47 = vcmask 197632
    %v48 = vsel %vm47, %v46, 0.0
    %49 = vadd.xlane.f32.xlu0 %v48
    %v50 = vpop.xlane.xlu0 %49
    %v51 = vrot.slane %v50, 4
    %v52 = vadd.f32 %v50, %v51
    %v53 = vrot.slane %v52, 2
    %v54 = vadd.f32 %v52, %v53
    %v55 = vrot.slane %v54, 1
    %v56 = vadd.f32 %v54, %v55
    %s57 = vtos %v56
    %v58 = vrcp.pop 50.0
    %v59 = vmul.f32 50.0, %v58
    %v60 = vsub.f32 1.0, %v59
    %v61 = vmul.f32 %v58, %v60
    %v62 = vadd.f32 %v58, %v61
    %vm63 = vweird.f32 %v58
    %v64 = vsel %vm63, %v58, %v62
    %s65 = vtos %v64
    %s66 = smul.f32 %s57, %s65
    %s67 = sadd.f32 %s66, 2.0
    %s68 = scalar_lea.smem [#allocation2], 0
    %69 = sst [smem:[%s68]] %s67
    // Predicated region
    $region10: #{avvp_criterion.1} parent=1 // pred_check
      _
    $region11: #{avvp_criterion.1} parent=1 // pred_check_branch
      %71 = sbr.rel (0) target = $region13
    $region12: #{avvp_criterion.1} parent=1 // pred_region
      %73 = vsyncadd [#allocation3], 0
      %s75 = sshll.u32 %s2, 4
      %s76 = int_to_ptr.hbm [resolvable:$true] %s75
      %78 = dma.smem_to_hbm [#allocation2], 16, %s76, [#allocation3]
    $region13: #{avvp_criterion.1} parent=1 // pred_fallthru
      _
    // Predicated region
    $region14: #{avvp_criterion.1} parent=1 // pred_check
      _
    $region15: #{avvp_criterion.1} parent=1 // pred_check_branch
      %80 = sbr.rel (0) target = $region17
    $region16: #{avvp_criterion.1} parent=1 // pred_region
      %82 = dma.done [#allocation3], 16
    $region17: #{avvp_criterion.1} parent=1 // pred_fallthru
      _
    %83 = sfence
    %84 = vsyncpa [#allocation3], 1

</llo_original>
